<compile_context>
chip_gen: v5e
topology: v5e:2x2
jax: 0.10.0
libtpu: 0.0.40
codegen_flags: <defaults>
</compile_context>

<pallas_src>
import jax
import jax.numpy as jnp
from jax import lax
from jax.experimental import pallas as pl
from jax.experimental.pallas import tpu as pltpu

# ----------------------------- shapes ---------------------------------------
S = 16          # max_length of the padded memory bank (sequence dim)
B = 8           # batch size
IN_DIM = 256    # self.head = MLP(256, feature_dim)  -> in_dim = 256
FEAT = 128      # feature_dim default
N_VIEWS = 2     # src + tgt contrastive views, fused along the batch dim


# ----------------------------- kernel ---------------------------------------
def _prelu(v, a):
    # PyTorch nn.PReLU with a single shared parameter (init 0.25)
    return jnp.where(v > 0, v, a * v)


def head_kernel(mem_ref,      # (S, 2B, IN_DIM) VMEM — both views stacked on batch
                w1s_ref,      # (IN_DIM, 2*FEAT) VMEM  [w1 | w_shortcut]
                b1s_ref,      # (1, 2*FEAT)      VMEM  [b1 | b_shortcut]
                w23_ref,      # (2, FEAT, FEAT)  VMEM  stacked w2, w3
                b23_ref,      # (2, FEAT)        VMEM  stacked b2, b3
                alpha_ref,    # (3,)             SMEM  PReLU slopes
                out_ref):     # (2B, FEAT)       VMEM
    # Sequence reduction == src_emb.transpose(0,1).sum(dim=1) in PyTorch,
    # done for both views at once.  Running accumulator keeps only one
    # (2B, 256) tile live (4 vregs) instead of the whole 256 KB slab.
    def body(i, acc):
        return acc + mem_ref[i]

    x = lax.fori_loop(0, S, body,
                      jnp.zeros((N_VIEWS * B, IN_DIM), jnp.float32),
                      unroll=True)

    # Fused first layer + shortcut: one 256-wide matmul fills the MXU columns
    # (v6e/v7x MXU is 256 wide); split the result afterwards.
    y = jnp.dot(x, w1s_ref[...], preferred_element_type=jnp.float32) + b1s_ref[...]
    h = _prelu(y[:, :FEAT], alpha_ref[0])     # L1 + PReLU
    sc = y[:, FEAT:]                          # linear_shortcut(x)  (no activation)

    h = _prelu(jnp.dot(h, w23_ref[0], preferred_element_type=jnp.float32)
               + b23_ref[0:1, :], alpha_ref[1])                      # L2 + PReLU
    h = _prelu(jnp.dot(h, w23_ref[1], preferred_element_type=jnp.float32)
               + b23_ref[1:2, :], alpha_ref[2])                      # L3 + PReLU

    out_ref[...] = (h + sc).astype(out_ref.dtype)


def mlp_head_fused(src_mem, tgt_mem, packed_params):
    """Single grid-less Pallas call for both views.

    Views are concatenated along the batch dimension in the wrapper (pure
    layout plumbing), so the kernel runs one (2B, 256) matmul chain instead
    of two (B, 256) chains.  Returns (src_2, tgt_2), each (B, FEAT).
    """
    mem = jnp.concatenate([src_mem, tgt_mem], axis=1)   # (S, 2B, IN_DIM)
    w1s, b1s, w23, b23, alphas = packed_params
    vmem = pl.BlockSpec(memory_space=pltpu.MemorySpace.VMEM)
    smem = pl.BlockSpec(memory_space=pltpu.MemorySpace.SMEM)
    out = pl.pallas_call(
        head_kernel,
        out_shape=jax.ShapeDtypeStruct((N_VIEWS * B, FEAT), jnp.float32),
        in_specs=[vmem, vmem, vmem, vmem, vmem, smem],
        out_specs=vmem,
    )(mem, w1s, b1s, w23, b23, alphas)
    return out[:B], out[B:]


# --------------------------- parameter init ----------------------------------
def init_params(key):
    """Deterministic init mirroring PyTorch defaults:
       Linear: U(-1/sqrt(fan_in), 1/sqrt(fan_in)) for W and b; PReLU slope 0.25.
       (Weights stored as (in, out), i.e. already transposed vs torch.)"""
    keys = jax.random.split(key, 8)

    def lin(kw, kb, fan_in, fan_out):
        k = 1.0 / jnp.sqrt(jnp.float32(fan_in))
        w = jax.random.uniform(kw, (fan_in, fan_out), jnp.float32, -k, k)
        b = jax.random.uniform(kb, (1, fan_out), jnp.float32, -k, k)
        return w, b

    w1, b1 = lin(keys[0], keys[1], IN_DIM, FEAT)
    w2, b2 = lin(keys[2], keys[3], FEAT, FEAT)
    w3, b3 = lin(keys[4], keys[5], FEAT, FEAT)
    ws, bs = lin(keys[6], keys[7], IN_DIM, FEAT)
    alphas = jnp.full((3,), 0.25, dtype=jnp.float32)      # nn.PReLU() default
    return (w1, b1, w2, b2, w3, b3, ws, bs, alphas)


def pack_params(params):
    """Pack 9 tensors into 5 slabs (fewer DMA descriptors, wider MXU matmul)."""
    w1, b1, w2, b2, w3, b3, ws, bs, alphas = params
    w1s = jnp.concatenate([w1, ws], axis=1)     # (IN_DIM, 2*FEAT) = (256, 256)
    b1s = jnp.concatenate([b1, bs], axis=1)     # (1, 2*FEAT)
    w23 = jnp.stack([w2, w3], axis=0)           # (2, FEAT, FEAT)
    b23 = jnp.concatenate([b2, b3], axis=0)     # (2, FEAT)
    return (w1s, b1s, w23, b23, alphas)


# ------------------------------ reference ------------------------------------
def head_ref(mem, params):
    w1, b1, w2, b2, w3, b3, ws, bs, a = params
    x = mem.sum(axis=0)
    h = _prelu(x @ w1 + b1, a[0])
    h = _prelu(h @ w2 + b2, a[1])
    h = _prelu(h @ w3 + b3, a[2])
    return h + (x @ ws + bs)


# -------------------------------- main ----------------------------------------
if __name__ == "__main__":
    key = jax.random.PRNGKey(0)
    k_p, k_src, k_tgt = jax.random.split(key, 3)

    params = init_params(k_p)
    packed = pack_params(params)

    # synthetic "padded_memory_bank" outputs of sharencoder for src / tgt views.
    # NOTE: the PyTorch code sums over all padded positions (no length mask),
    # which is exactly what the kernel does.
    src_mem = jax.random.normal(k_src, (S, B, IN_DIM), dtype=jnp.float32)
    tgt_mem = jax.random.normal(k_tgt, (S, B, IN_DIM), dtype=jnp.float32)

    src_2, tgt_2 = mlp_head_fused(src_mem, tgt_mem, packed)   # each (B, FEAT)
    jax.block_until_ready((src_2, tgt_2))

    # correctness check against pure-JAX reference
    ref_src = head_ref(src_mem, params)
    ref_tgt = head_ref(tgt_mem, params)
    assert jnp.allclose(src_2, ref_src, atol=1e-4, rtol=1e-4)
    assert jnp.allclose(tgt_2, ref_tgt, atol=1e-4, rtol=1e-4)

    # TODO(synk): others_simclr_loss(src_2, tgt_2, tau=100) is an external,
    # undefined function; the contrastive loss itself is not reproduced here.

    print("KERNEL_OK")
</pallas_src>

<mosaic_0001>
module attributes {stable_mosaic.version = 11 : i64} {
  func.func @head_kernel(%arg0: memref<16x16x256xf32, #tpu.memory_space<vmem>>, %arg1: memref<256x256xf32, #tpu.memory_space<vmem>>, %arg2: memref<1x256xf32, #tpu.memory_space<vmem>>, %arg3: memref<2x128x128xf32, #tpu.memory_space<vmem>>, %arg4: memref<2x128xf32, #tpu.memory_space<vmem>>, %arg5: memref<3xf32, #tpu.memory_space<smem>>, %arg6: memref<16x128xf32, #tpu.memory_space<vmem>>) attributes {dimension_semantics = [], scalar_prefetch = 0 : i64, scratch_operands = 0 : i64, tpu.core_type = #tpu.core_type<tc>} {
    %cst = arith.constant 0.000000e+00 : f32
    %0 = vector.broadcast %cst : f32 to vector<16x256xf32>
    %c0_i32 = arith.constant 0 : i32
    %1 = arith.index_cast %c0_i32 : i32 to index
    %c0 = arith.constant 0 : index
    %c0_0 = arith.constant 0 : index
    %2 = vector.load %arg0[%1, %c0, %c0_0] : memref<16x16x256xf32, #tpu.memory_space<vmem>>, vector<1x16x256xf32>
    %3 = vector.shape_cast %2 : vector<1x16x256xf32> to vector<16x256xf32>
    %4 = arith.addf %0, %3 : vector<16x256xf32>
    %c1_i32 = arith.constant 1 : i32
    %5 = arith.index_cast %c1_i32 : i32 to index
    %c0_1 = arith.constant 0 : index
    %c0_2 = arith.constant 0 : index
    %6 = vector.load %arg0[%5, %c0_1, %c0_2] : memref<16x16x256xf32, #tpu.memory_space<vmem>>, vector<1x16x256xf32>
    %7 = vector.shape_cast %6 : vector<1x16x256xf32> to vector<16x256xf32>
    %8 = arith.addf %4, %7 : vector<16x256xf32>
    %c2_i32 = arith.constant 2 : i32
    %9 = arith.index_cast %c2_i32 : i32 to index
    %c0_3 = arith.constant 0 : index
    %c0_4 = arith.constant 0 : index
    %10 = vector.load %arg0[%9, %c0_3, %c0_4] : memref<16x16x256xf32, #tpu.memory_space<vmem>>, vector<1x16x256xf32>
    %11 = vector.shape_cast %10 : vector<1x16x256xf32> to vector<16x256xf32>
    %12 = arith.addf %8, %11 : vector<16x256xf32>
    %c3_i32 = arith.constant 3 : i32
    %13 = arith.index_cast %c3_i32 : i32 to index
    %c0_5 = arith.constant 0 : index
    %c0_6 = arith.constant 0 : index
    %14 = vector.load %arg0[%13, %c0_5, %c0_6] : memref<16x16x256xf32, #tpu.memory_space<vmem>>, vector<1x16x256xf32>
    %15 = vector.shape_cast %14 : vector<1x16x256xf32> to vector<16x256xf32>
    %16 = arith.addf %12, %15 : vector<16x256xf32>
    %c4_i32 = arith.constant 4 : i32
    %17 = arith.index_cast %c4_i32 : i32 to index
    %c0_7 = arith.constant 0 : index
    %c0_8 = arith.constant 0 : index
    %18 = vector.load %arg0[%17, %c0_7, %c0_8] : memref<16x16x256xf32, #tpu.memory_space<vmem>>, vector<1x16x256xf32>
    %19 = vector.shape_cast %18 : vector<1x16x256xf32> to vector<16x256xf32>
    %20 = arith.addf %16, %19 : vector<16x256xf32>
    %c5_i32 = arith.constant 5 : i32
    %21 = arith.index_cast %c5_i32 : i32 to index
    %c0_9 = arith.constant 0 : index
    %c0_10 = arith.constant 0 : index
    %22 = vector.load %arg0[%21, %c0_9, %c0_10] : memref<16x16x256xf32, #tpu.memory_space<vmem>>, vector<1x16x256xf32>
    %23 = vector.shape_cast %22 : vector<1x16x256xf32> to vector<16x256xf32>
    %24 = arith.addf %20, %23 : vector<16x256xf32>
    %c6_i32 = arith.constant 6 : i32
    %25 = arith.index_cast %c6_i32 : i32 to index
    %c0_11 = arith.constant 0 : index
    %c0_12 = arith.constant 0 : index
    %26 = vector.load %arg0[%25, %c0_11, %c0_12] : memref<16x16x256xf32, #tpu.memory_space<vmem>>, vector<1x16x256xf32>
    %27 = vector.shape_cast %26 : vector<1x16x256xf32> to vector<16x256xf32>
    %28 = arith.addf %24, %27 : vector<16x256xf32>
    %c7_i32 = arith.constant 7 : i32
    %29 = arith.index_cast %c7_i32 : i32 to index
    %c0_13 = arith.constant 0 : index
    %c0_14 = arith.constant 0 : index
    %30 = vector.load %arg0[%29, %c0_13, %c0_14] : memref<16x16x256xf32, #tpu.memory_space<vmem>>, vector<1x16x256xf32>
    %31 = vector.shape_cast %30 : vector<1x16x256xf32> to vector<16x256xf32>
    %32 = arith.addf %28, %31 : vector<16x256xf32>
    %c8_i32 = arith.constant 8 : i32
    %33 = arith.index_cast %c8_i32 : i32 to index
    %c0_15 = arith.constant 0 : index
    %c0_16 = arith.constant 0 : index
    %34 = vector.load %arg0[%33, %c0_15, %c0_16] : memref<16x16x256xf32, #tpu.memory_space<vmem>>, vector<1x16x256xf32>
    %35 = vector.shape_cast %34 : vector<1x16x256xf32> to vector<16x256xf32>
    %36 = arith.addf %32, %35 : vector<16x256xf32>
    %c9_i32 = arith.constant 9 : i32
    %37 = arith.index_cast %c9_i32 : i32 to index
    %c0_17 = arith.constant 0 : index
    %c0_18 = arith.constant 0 : index
    %38 = vector.load %arg0[%37, %c0_17, %c0_18] : memref<16x16x256xf32, #tpu.memory_space<vmem>>, vector<1x16x256xf32>
    %39 = vector.shape_cast %38 : vector<1x16x256xf32> to vector<16x256xf32>
    %40 = arith.addf %36, %39 : vector<16x256xf32>
    %c10_i32 = arith.constant 10 : i32
    %41 = arith.index_cast %c10_i32 : i32 to index
    %c0_19 = arith.constant 0 : index
    %c0_20 = arith.constant 0 : index
    %42 = vector.load %arg0[%41, %c0_19, %c0_20] : memref<16x16x256xf32, #tpu.memory_space<vmem>>, vector<1x16x256xf32>
    %43 = vector.shape_cast %42 : vector<1x16x256xf32> to vector<16x256xf32>
    %44 = arith.addf %40, %43 : vector<16x256xf32>
    %c11_i32 = arith.constant 11 : i32
    %45 = arith.index_cast %c11_i32 : i32 to index
    %c0_21 = arith.constant 0 : index
    %c0_22 = arith.constant 0 : index
    %46 = vector.load %arg0[%45, %c0_21, %c0_22] : memref<16x16x256xf32, #tpu.memory_space<vmem>>, vector<1x16x256xf32>
    %47 = vector.shape_cast %46 : vector<1x16x256xf32> to vector<16x256xf32>
    %48 = arith.addf %44, %47 : vector<16x256xf32>
    %c12_i32 = arith.constant 12 : i32
    %49 = arith.index_cast %c12_i32 : i32 to index
    %c0_23 = arith.constant 0 : index
    %c0_24 = arith.constant 0 : index
    %50 = vector.load %arg0[%49, %c0_23, %c0_24] : memref<16x16x256xf32, #tpu.memory_space<vmem>>, vector<1x16x256xf32>
    %51 = vector.shape_cast %50 : vector<1x16x256xf32> to vector<16x256xf32>
    %52 = arith.addf %48, %51 : vector<16x256xf32>
    %c13_i32 = arith.constant 13 : i32
    %53 = arith.index_cast %c13_i32 : i32 to index
    %c0_25 = arith.constant 0 : index
    %c0_26 = arith.constant 0 : index
    %54 = vector.load %arg0[%53, %c0_25, %c0_26] : memref<16x16x256xf32, #tpu.memory_space<vmem>>, vector<1x16x256xf32>
    %55 = vector.shape_cast %54 : vector<1x16x256xf32> to vector<16x256xf32>
    %56 = arith.addf %52, %55 : vector<16x256xf32>
    %c14_i32 = arith.constant 14 : i32
    %57 = arith.index_cast %c14_i32 : i32 to index
    %c0_27 = arith.constant 0 : index
    %c0_28 = arith.constant 0 : index
    %58 = vector.load %arg0[%57, %c0_27, %c0_28] : memref<16x16x256xf32, #tpu.memory_space<vmem>>, vector<1x16x256xf32>
    %59 = vector.shape_cast %58 : vector<1x16x256xf32> to vector<16x256xf32>
    %60 = arith.addf %56, %59 : vector<16x256xf32>
    %c15_i32 = arith.constant 15 : i32
    %61 = arith.index_cast %c15_i32 : i32 to index
    %c0_29 = arith.constant 0 : index
    %c0_30 = arith.constant 0 : index
    %62 = vector.load %arg0[%61, %c0_29, %c0_30] : memref<16x16x256xf32, #tpu.memory_space<vmem>>, vector<1x16x256xf32>
    %63 = vector.shape_cast %62 : vector<1x16x256xf32> to vector<16x256xf32>
    %64 = arith.addf %60, %63 : vector<16x256xf32>
    %c16_i32 = arith.constant 16 : i32
    %c0_31 = arith.constant 0 : index
    %c0_32 = arith.constant 0 : index
    %65 = vector.load %arg1[%c0_31, %c0_32] : memref<256x256xf32, #tpu.memory_space<vmem>>, vector<256x256xf32>
    %cst_33 = arith.constant dense<0.000000e+00> : vector<16x256xf32>
    %66 = tpu.matmul %64, %65, %cst_33 {dimension_numbers = #tpu.dot_dimension_numbers<[1], [0], [0], [1], [0, 0, 1, 1], [], []>} : vector<16x256xf32>, vector<256x256xf32>, vector<16x256xf32> -> vector<16x256xf32>
    %c0_34 = arith.constant 0 : index
    %c0_35 = arith.constant 0 : index
    %67 = vector.load %arg2[%c0_34, %c0_35] : memref<1x256xf32, #tpu.memory_space<vmem>>, vector<1x256xf32>
    %68 = vector.broadcast %67 : vector<1x256xf32> to vector<16x256xf32>
    %69 = arith.addf %66, %68 : vector<16x256xf32>
    %70 = vector.extract_strided_slice %69 {offsets = [0, 0], sizes = [16, 128], strides = [1, 1]} : vector<16x256xf32> to vector<16x128xf32>
    %c0_36 = arith.constant 0 : index
    %71 = memref.load %arg5[%c0_36] : memref<3xf32, #tpu.memory_space<smem>>
    %cst_37 = arith.constant 0.000000e+00 : f32
    %72 = vector.broadcast %cst_37 : f32 to vector<16x128xf32>
    %73 = arith.cmpf ogt, %70, %72 : vector<16x128xf32>
    %74 = vector.broadcast %71 : f32 to vector<16x128xf32>
    %75 = arith.mulf %74, %70 : vector<16x128xf32>
    %76 = arith.select %73, %70, %75 : vector<16x128xi1>, vector<16x128xf32>
    %77 = vector.extract_strided_slice %69 {offsets = [0, 128], sizes = [16, 128], strides = [1, 1]} : vector<16x256xf32> to vector<16x128xf32>
    %c0_38 = arith.constant 0 : index
    %c0_39 = arith.constant 0 : index
    %c0_40 = arith.constant 0 : index
    %78 = vector.load %arg3[%c0_38, %c0_39, %c0_40] : memref<2x128x128xf32, #tpu.memory_space<vmem>>, vector<1x128x128xf32>
    %79 = vector.shape_cast %78 : vector<1x128x128xf32> to vector<128x128xf32>
    %cst_41 = arith.constant dense<0.000000e+00> : vector<16x128xf32>
    %80 = tpu.matmul %76, %79, %cst_41 {dimension_numbers = #tpu.dot_dimension_numbers<[1], [0], [0], [1], [0, 0, 1, 1], [], []>} : vector<16x128xf32>, vector<128x128xf32>, vector<16x128xf32> -> vector<16x128xf32>
    %c0_42 = arith.constant 0 : index
    %c0_43 = arith.constant 0 : index
    %81 = vector.load %arg4[%c0_42, %c0_43] : memref<2x128xf32, #tpu.memory_space<vmem>>, vector<1x128xf32>
    %82 = vector.broadcast %81 : vector<1x128xf32> to vector<16x128xf32>
    %83 = arith.addf %80, %82 : vector<16x128xf32>
    %c1 = arith.constant 1 : index
    %84 = memref.load %arg5[%c1] : memref<3xf32, #tpu.memory_space<smem>>
    %cst_44 = arith.constant 0.000000e+00 : f32
    %85 = vector.broadcast %cst_44 : f32 to vector<16x128xf32>
    %86 = arith.cmpf ogt, %83, %85 : vector<16x128xf32>
    %87 = vector.broadcast %84 : f32 to vector<16x128xf32>
    %88 = arith.mulf %87, %83 : vector<16x128xf32>
    %89 = arith.select %86, %83, %88 : vector<16x128xi1>, vector<16x128xf32>
    %c1_45 = arith.constant 1 : index
    %c0_46 = arith.constant 0 : index
    %c0_47 = arith.constant 0 : index
    %90 = vector.load %arg3[%c1_45, %c0_46, %c0_47] : memref<2x128x128xf32, #tpu.memory_space<vmem>>, vector<1x128x128xf32>
    %91 = vector.shape_cast %90 : vector<1x128x128xf32> to vector<128x128xf32>
    %cst_48 = arith.constant dense<0.000000e+00> : vector<16x128xf32>
    %92 = tpu.matmul %89, %91, %cst_48 {dimension_numbers = #tpu.dot_dimension_numbers<[1], [0], [0], [1], [0, 0, 1, 1], [], []>} : vector<16x128xf32>, vector<128x128xf32>, vector<16x128xf32> -> vector<16x128xf32>
    %c1_49 = arith.constant 1 : index
    %c0_50 = arith.constant 0 : index
    %93 = vector.load %arg4[%c1_49, %c0_50] : memref<2x128xf32, #tpu.memory_space<vmem>>, vector<1x128xf32>
    %94 = vector.broadcast %93 : vector<1x128xf32> to vector<16x128xf32>
    %95 = arith.addf %92, %94 : vector<16x128xf32>
    %c2 = arith.constant 2 : index
    %96 = memref.load %arg5[%c2] : memref<3xf32, #tpu.memory_space<smem>>
    %cst_51 = arith.constant 0.000000e+00 : f32
    %97 = vector.broadcast %cst_51 : f32 to vector<16x128xf32>
    %98 = arith.cmpf ogt, %95, %97 : vector<16x128xf32>
    %99 = vector.broadcast %96 : f32 to vector<16x128xf32>
    %100 = arith.mulf %99, %95 : vector<16x128xf32>
    %101 = arith.select %98, %95, %100 : vector<16x128xi1>, vector<16x128xf32>
    %102 = arith.addf %101, %77 : vector<16x128xf32>
    %c0_52 = arith.constant 0 : index
    %c0_53 = arith.constant 0 : index
    %103 = vector.load %arg6[%c0_52, %c0_53] : memref<16x128xf32, #tpu.memory_space<vmem>>, vector<16x128xf32>
    tpu.vector_store %arg6[%c0_52, %c0_53], %102 {strides = array<i32>} : memref<16x128xf32, #tpu.memory_space<vmem>>, vector<16x128xf32>,
    return
  }
}

</mosaic_0001>

<llo_original>
// kernel: tpu_custom_call.1
$region0: #{tpu_custom_call.1}
  #allocation0 [shape = 'u32[]', space=smem, size = 0x4, offset = 0x4, fixed_abs, tag = 'smem constant byte address 0x4 - core index']
  #allocation1 [shape = 'u32[72,128]{1,0:T(1,128)}', space=vmem, size = 0x9000, scoped, tag = 'internal scratch']
  %s0 = inlined_call_operand.hbm [shape: f32[16,16,256], index: 0, kind: input, shape index: {}]
  %s1 = inlined_call_operand.hbm [shape: f32[256,256], index: 1, kind: input, shape index: {}]
  %s2 = inlined_call_operand.hbm [shape: f32[1,256], index: 2, kind: input, shape index: {}]
  %s3 = inlined_call_operand.hbm [shape: f32[2,128,128], index: 3, kind: input, shape index: {}]
  %s4 = inlined_call_operand.vmem [shape: f32[2,128], index: 4, kind: input, shape index: {}]
  %s5 = inlined_call_operand.vmem [shape: f32[3], index: 5, kind: input, shape index: {}]
  %s6 = inlined_call_operand.hbm [shape: f32[16,128], index: 6, kind: output, shape index: {}]
  %s7 = sld [smem:[#allocation0]]
  $region54: #{tpu_custom_call.1} parent=0
    _
  %s9 = ssub.s32 1, %s7
  %s10 = scalar_select 0, %s9, %s7
  $region1: #{tpu_custom_call.1} parent=0
    #allocation2 [shape = 'u8[262144]{0}', space=vmem, size = 0x40000, scoped, tag = 'input window, operand 0, single buffered']
    #allocation3 [shape = 's32[1]{0}', space=sflag, size = 0x4, scoped, tag = 'scoped memory for tpu_custom_call.1']
    #allocation4 [shape = 's32[1]{0}', space=sflag, size = 0x4, scoped, tag = 'scoped memory for tpu_custom_call.1']
    #allocation5 [shape = 's32[1]{0}', space=sflag, size = 0x4, scoped, tag = 'scoped memory for tpu_custom_call.1']
    #allocation6 [shape = 'u8[262144]{0}', space=vmem, size = 0x40000, scoped, tag = 'input window, operand 1, single buffered']
    #allocation7 [shape = 's32[1]{0}', space=sflag, size = 0x4, scoped, tag = 'scoped memory for tpu_custom_call.1']
    #allocation8 [shape = 'u8[1024]{0}', space=vmem, size = 0x400, scoped, tag = 'input window, operand 2, single buffered']
    #allocation9 [shape = 'u8[131072]{0}', space=vmem, size = 0x20000, scoped, tag = 'input window, operand 3, single buffered']
    #allocation10 [shape = 's32[1]{0}', space=sflag, size = 0x4, scoped, tag = 'scoped memory for tpu_custom_call.1']
    #allocation11 [shape = 'u8[512]{0}', space=smem, size = 0x200, scoped, tag = 'input window, operand 5, single buffered']
    #allocation12 [shape = 'u8[8192]{0}', space=vmem, size = 0x2000, scoped, tag = 'output window, operand 0, single buffered']
    %11 = vsyncpa [#allocation3], 0
    %12 = vsyncpa [#allocation7], 0
    %13 = vsyncpa [#allocation10], 0
    %14 = vsyncpa [#allocation5], 0
    %15 = vsyncpa [#allocation4], 0
    // Predicated region
    $region2: #{tpu_custom_call.1} parent=1 // pred_check
      _
    $region3: #{tpu_custom_call.1} parent=1 // pred_check_branch
      %17 = sbr.rel (0) target = $region5
    $region4: #{tpu_custom_call.1} parent=1 // pred_region
      %19 = vsyncadd [#allocation3], 0
      %s20 = sshll.u32 %s0, 4
      %s21 = int_to_ptr.hbm [resolvable:$true] %s20
      %s22 = sshll.u32 [#allocation2], 4
      %s23 = int_to_ptr.vmem [resolvable:$true] %s22
      %28 = dma.hbm_to_vmem [thread:$0]  %s21, 8192, %s23, [#allocation3], 256, 256, 16
    $region5: #{tpu_custom_call.1} parent=1 // pred_fallthru
      _
    // Predicated region
    $region6: #{tpu_custom_call.1} parent=1 // pred_check
      _
    $region7: #{tpu_custom_call.1} parent=1 // pred_check_branch
      %30 = sbr.rel (0) target = $region9
    $region8: #{tpu_custom_call.1} parent=1 // pred_region
      %32 = vsyncadd [#allocation7], 0
      %s33 = sshll.u32 %s1, 4
      %s34 = int_to_ptr.hbm [resolvable:$true] %s33
      %s35 = sshll.u32 [#allocation6], 4
      %s36 = int_to_ptr.vmem [resolvable:$true] %s35
      %41 = dma.hbm_to_vmem [thread:$0]  %s34, 8192, %s36, [#allocation7], 256, 256, 16
    $region9: #{tpu_custom_call.1} parent=1 // pred_fallthru
      _
    // Predicated region
    $region10: #{tpu_custom_call.1} parent=1 // pred_check
      _
    $region11: #{tpu_custom_call.1} parent=1 // pred_check_branch
      %43 = sbr.rel (0) target = $region13
    $region12: #{tpu_custom_call.1} parent=1 // pred_region
      %45 = vsyncadd [#allocation7], 0
      %s47 = sshll.u32 %s2, 4
      %s48 = int_to_ptr.hbm [resolvable:$true] %s47
      %s49 = sshll.u32 [#allocation8], 4
      %s50 = int_to_ptr.vmem [resolvable:$true] %s49
      %52 = dma.hbm_to_vmem [thread:$0]  %s48, 32, %s50, [#allocation7]
    $region13: #{tpu_custom_call.1} parent=1 // pred_fallthru
      _
    // Predicated region
    $region14: #{tpu_custom_call.1} parent=1 // pred_check
      _
    $region15: #{tpu_custom_call.1} parent=1 // pred_check_branch
      %54 = sbr.rel (0) target = $region17
    $region16: #{tpu_custom_call.1} parent=1 // pred_region
      %56 = vsyncadd [#allocation10], 0
      %s57 = sshll.u32 %s3, 4
      %s58 = int_to_ptr.hbm [resolvable:$true] %s57
      %s59 = sshll.u32 [#allocation9], 4
      %s60 = int_to_ptr.vmem [resolvable:$true] %s59
      %65 = dma.hbm_to_vmem [thread:$0]  %s58, 4096, %s60, [#allocation10], 128, 128, 8
    $region17: #{tpu_custom_call.1} parent=1 // pred_fallthru
      _
    // Predicated region
    $region18: #{tpu_custom_call.1} parent=1 // pred_check
      _
    $region19: #{tpu_custom_call.1} parent=1 // pred_check_branch
      %67 = sbr.rel (0) target = $region21
    $region20: #{tpu_custom_call.1} parent=1 // pred_region
      _
    $region21: #{tpu_custom_call.1} parent=1 // pred_fallthru
      _
    // Predicated region
    $region22: #{tpu_custom_call.1} parent=1 // pred_check
      _
    $region23: #{tpu_custom_call.1} parent=1 // pred_check_branch
      %69 = sbr.rel (0) target = $region25
    $region24: #{tpu_custom_call.1} parent=1 // pred_region
      %71 = vsyncadd [#allocation5], 0
      %s73 = sshll.u32 %s5, 4
      %s74 = int_to_ptr.vmem [resolvable:$true] %s73
      %76 = dma.vmem_to_smem %s74, 16, [#allocation11], [#allocation5]
    $region25: #{tpu_custom_call.1} parent=1 // pred_fallthru
      _
    // Predicated region
    $region26: #{tpu_custom_call.1} parent=1 // pred_check
      _
    $region27: #{tpu_custom_call.1} parent=1 // pred_check_branch
      %78 = sbr.rel (0) target = $region29
    $region28: #{tpu_custom_call.1} parent=1 // pred_region
      %80 = dma.done [#allocation3], 8192
    $region29: #{tpu_custom_call.1} parent=1 // pred_fallthru
      _
    // Predicated region
    $region30: #{tpu_custom_call.1} parent=1 // pred_check
      _
    $region31: #{tpu_custom_call.1} parent=1 // pred_check_branch
      %82 = sbr.rel (0) target = $region33
    $region32: #{tpu_custom_call.1} parent=1 // pred_region
      %84 = dma.done [#allocation7], 8192
    $region33: #{tpu_custom_call.1} parent=1 // pred_fallthru
      _
    // Predicated region
    $region34: #{tpu_custom_call.1} parent=1 // pred_check
      _
    $region35: #{tpu_custom_call.1} parent=1 // pred_check_branch
      %86 = sbr.rel (0) target = $region37
    $region36: #{tpu_custom_call.1} parent=1 // pred_region
      %88 = dma.done [#allocation7], 32
    $region37: #{tpu_custom_call.1} parent=1 // pred_fallthru
      _
    // Predicated region
    $region38: #{tpu_custom_call.1} parent=1 // pred_check
      _
    $region39: #{tpu_custom_call.1} parent=1 // pred_check_branch
      %90 = sbr.rel (0) target = $region41
    $region40: #{tpu_custom_call.1} parent=1 // pred_region
      %92 = dma.done [#allocation10], 4096
    $region41: #{tpu_custom_call.1} parent=1 // pred_fallthru
      _
    // Predicated region
    $region42: #{tpu_custom_call.1} parent=1 // pred_check
      _
    $region43: #{tpu_custom_call.1} parent=1 // pred_check_branch
      %94 = sbr.rel (0) target = $region45
    $region44: #{tpu_custom_call.1} parent=1 // pred_region
      %96 = dma.done [#allocation5], 16
    $region45: #{tpu_custom_call.1} parent=1 // pred_fallthru
      _
    %97 = sfence
    %v98 = vld [vmem:[#allocation2] sm:$0xff]
    %v99 = vld [vmem:[#allocation2 + $0x8] sm:$0xff]
    %v100 = vld [vmem:[#allocation2 + $0x10] sm:$0xff]
    %v101 = vld [vmem:[#allocation2 + $0x18] sm:$0xff]
    %v102 = vadd.f32 %v98, 0.0
    %v103 = vadd.f32 %v99, 0.0
    %v104 = vadd.f32 %v100, 0.0
    %v105 = vadd.f32 %v101, 0.0
    %s106 = scalar_lea.vmem [#allocation2], 32
    %v107 = vld [vmem:[%s106] sm:$0xff]
    %v108 = vld [vmem:[%s106 + $0x8] sm:$0xff]
    %v109 = vld [vmem:[%s106 + $0x10] sm:$0xff]
    %v110 = vld [vmem:[%s106 + $0x18] sm:$0xff]
    %v111 = vadd.f32 %v102, %v107
    %v112 = vadd.f32 %v103, %v108
    %v113 = vadd.f32 %v104, %v109
    %v114 = vadd.f32 %v105, %v110
    %s115 = scalar_lea.vmem [#allocation2], 64
    %v116 = vld [vmem:[%s115] sm:$0xff]
    %v117 = vld [vmem:[%s115 + $0x8] sm:$0xff]
    %v118 = vld [vmem:[%s115 + $0x10] sm:$0xff]
    %v119 = vld [vmem:[%s115 + $0x18] sm:$0xff]
    %v120 = vadd.f32 %v111, %v116
    %v121 = vadd.f32 %v112, %v117
    %v122 = vadd.f32 %v113, %v118
    %v123 = vadd.f32 %v114, %v119
    %s124 = scalar_lea.vmem [#allocation2], 96
    %v125 = vld [vmem:[%s124] sm:$0xff]
    %v126 = vld [vmem:[%s124 + $0x8] sm:$0xff]
    %v127 = vld [vmem:[%s124 + $0x10] sm:$0xff]
    %v128 = vld [vmem:[%s124 + $0x18] sm:$0xff]
    %v129 = vadd.f32 %v120, %v125
    %v130 = vadd.f32 %v121, %v126
    %v131 = vadd.f32 %v122, %v127
    %v132 = vadd.f32 %v123, %v128
    %s133 = scalar_lea.vmem [#allocation2], 128
    %v134 = vld [vmem:[%s133] sm:$0xff]
    %v135 = vld [vmem:[%s133 + $0x8] sm:$0xff]
    %v136 = vld [vmem:[%s133 + $0x10] sm:$0xff]
    %v137 = vld [vmem:[%s133 + $0x18] sm:$0xff]
    %v138 = vadd.f32 %v129, %v134
    %v139 = vadd.f32 %v130, %v135
    %v140 = vadd.f32 %v131, %v136
    %v141 = vadd.f32 %v132, %v137
    %s142 = scalar_lea.vmem [#allocation2], 160
    %v143 = vld [vmem:[%s142] sm:$0xff]
    %v144 = vld [vmem:[%s142 + $0x8] sm:$0xff]
    %v145 = vld [vmem:[%s142 + $0x10] sm:$0xff]
    %v146 = vld [vmem:[%s142 + $0x18] sm:$0xff]
    %v147 = vadd.f32 %v138, %v143
    %v148 = vadd.f32 %v139, %v144
    %v149 = vadd.f32 %v140, %v145
    %v150 = vadd.f32 %v141, %v146
    %s151 = scalar_lea.vmem [#allocation2], 192
    %v152 = vld [vmem:[%s151] sm:$0xff]
    %v153 = vld [vmem:[%s151 + $0x8] sm:$0xff]
    %v154 = vld [vmem:[%s151 + $0x10] sm:$0xff]
    %v155 = vld [vmem:[%s151 + $0x18] sm:$0xff]
    %v156 = vadd.f32 %v147, %v152
    %v157 = vadd.f32 %v148, %v153
    %v158 = vadd.f32 %v149, %v154
    %v159 = vadd.f32 %v150, %v155
    %s160 = scalar_lea.vmem [#allocation2], 224
    %v161 = vld [vmem:[%s160] sm:$0xff]
    %v162 = vld [vmem:[%s160 + $0x8] sm:$0xff]
    %v163 = vld [vmem:[%s160 + $0x10] sm:$0xff]
    %v164 = vld [vmem:[%s160 + $0x18] sm:$0xff]
    %v165 = vadd.f32 %v156, %v161
    %v166 = vadd.f32 %v157, %v162
    %v167 = vadd.f32 %v158, %v163
    %v168 = vadd.f32 %v159, %v164
    %s169 = scalar_lea.vmem [#allocation2], 256
    %v170 = vld [vmem:[%s169] sm:$0xff]
    %v171 = vld [vmem:[%s169 + $0x8] sm:$0xff]
    %v172 = vld [vmem:[%s169 + $0x10] sm:$0xff]
    %v173 = vld [vmem:[%s169 + $0x18] sm:$0xff]
    %v174 = vadd.f32 %v165, %v170
    %v175 = vadd.f32 %v166, %v171
    %v176 = vadd.f32 %v167, %v172
    %v177 = vadd.f32 %v168, %v173
    %s178 = scalar_lea.vmem [#allocation2], 288
    %v179 = vld [vmem:[%s178] sm:$0xff]
    %v180 = vld [vmem:[%s178 + $0x8] sm:$0xff]
    %v181 = vld [vmem:[%s178 + $0x10] sm:$0xff]
    %v182 = vld [vmem:[%s178 + $0x18] sm:$0xff]
    %v183 = vadd.f32 %v174, %v179
    %v184 = vadd.f32 %v175, %v180
    %v185 = vadd.f32 %v176, %v181
    %v186 = vadd.f32 %v177, %v182
    %s187 = scalar_lea.vmem [#allocation2], 320
    %v188 = vld [vmem:[%s187] sm:$0xff]
    %v189 = vld [vmem:[%s187 + $0x8] sm:$0xff]
    %v190 = vld [vmem:[%s187 + $0x10] sm:$0xff]
    %v191 = vld [vmem:[%s187 + $0x18] sm:$0xff]
    %v192 = vadd.f32 %v183, %v188
    %v193 = vadd.f32 %v184, %v189
    %v194 = vadd.f32 %v185, %v190
    %v195 = vadd.f32 %v186, %v191
    %s196 = scalar_lea.vmem [#allocation2], 352
    %v197 = vld [vmem:[%s196] sm:$0xff]
    %v198 = vld [vmem:[%s196 + $0x8] sm:$0xff]
    %v199 = vld [vmem:[%s196 + $0x10] sm:$0xff]
    %v200 = vld [vmem:[%s196 + $0x18] sm:$0xff]
    %v201 = vadd.f32 %v192, %v197
    %v202 = vadd.f32 %v193, %v198
    %v203 = vadd.f32 %v194, %v199
    %v204 = vadd.f32 %v195, %v200
    %s205 = scalar_lea.vmem [#allocation2], 384
    %v206 = vld [vmem:[%s205] sm:$0xff]
    %v207 = vld [vmem:[%s205 + $0x8] sm:$0xff]
    %v208 = vld [vmem:[%s205 + $0x10] sm:$0xff]
    %v209 = vld [vmem:[%s205 + $0x18] sm:$0xff]
    %v210 = vadd.f32 %v201, %v206
    %v211 = vadd.f32 %v202, %v207
    %v212 = vadd.f32 %v203, %v208
    %v213 = vadd.f32 %v204, %v209
    %s214 = scalar_lea.vmem [#allocation2], 416
    %v215 = vld [vmem:[%s214] sm:$0xff]
    %v216 = vld [vmem:[%s214 + $0x8] sm:$0xff]
    %v217 = vld [vmem:[%s214 + $0x10] sm:$0xff]
    %v218 = vld [vmem:[%s214 + $0x18] sm:$0xff]
    %v219 = vadd.f32 %v210, %v215
    %v220 = vadd.f32 %v211, %v216
    %v221 = vadd.f32 %v212, %v217
    %v222 = vadd.f32 %v213, %v218
    %s223 = scalar_lea.vmem [#allocation2], 448
    %v224 = vld [vmem:[%s223] sm:$0xff]
    %v225 = vld [vmem:[%s223 + $0x8] sm:$0xff]
    %v226 = vld [vmem:[%s223 + $0x10] sm:$0xff]
    %v227 = vld [vmem:[%s223 + $0x18] sm:$0xff]
    %v228 = vadd.f32 %v219, %v224
    %v229 = vadd.f32 %v220, %v225
    %v230 = vadd.f32 %v221, %v226
    %v231 = vadd.f32 %v222, %v227
    %s232 = scalar_lea.vmem [#allocation2], 480
    %v233 = vld [vmem:[%s232] sm:$0xff]
    %v234 = vld [vmem:[%s232 + $0x8] sm:$0xff]
    %v235 = vld [vmem:[%s232 + $0x10] sm:$0xff]
    %v236 = vld [vmem:[%s232 + $0x18] sm:$0xff]
    %v237 = vadd.f32 %v228, %v233
    %v238 = vadd.f32 %v229, %v234
    %v239 = vadd.f32 %v230, %v235
    %v240 = vadd.f32 %v231, %v236
    %v241 = vld [vmem:[#allocation6] sm:$0xff]
    %v242 = vld [vmem:[#allocation6 + $0x8] sm:$0xff]
    %v243 = vld [vmem:[#allocation6 + $0x10] sm:$0xff]
    %v244 = vld [vmem:[#allocation6 + $0x18] sm:$0xff]
    %v245 = vld [vmem:[#allocation6 + $0x20] sm:$0xff]
    %v246 = vld [vmem:[#allocation6 + $0x28] sm:$0xff]
    %v247 = vld [vmem:[#allocation6 + $0x30] sm:$0xff]
    %v248 = vld [vmem:[#allocation6 + $0x38] sm:$0xff]
    %v249 = vld [vmem:[#allocation6 + $0x40] sm:$0xff]
    %v250 = vld [vmem:[#allocation6 + $0x48] sm:$0xff]
    %v251 = vld [vmem:[#allocation6 + $0x50] sm:$0xff]
    %v252 = vld [vmem:[#allocation6 + $0x58] sm:$0xff]
    %v253 = vld [vmem:[#allocation6 + $0x60] sm:$0xff]
    %v254 = vld [vmem:[#allocation6 + $0x68] sm:$0xff]
    %v255 = vld [vmem:[#allocation6 + $0x70] sm:$0xff]
    %v256 = vld [vmem:[#allocation6 + $0x78] sm:$0xff]
    %v257 = vld [vmem:[#allocation6 + $0x80] sm:$0xff]
    %v258 = vld [vmem:[#allocation6 + $0x88] sm:$0xff]
    %v259 = vld [vmem:[#allocation6 + $0x90] sm:$0xff]
    %v260 = vld [vmem:[#allocation6 + $0x98] sm:$0xff]
    %v261 = vld [vmem:[#allocation6 + $0xa0] sm:$0xff]
    %v262 = vld [vmem:[#allocation6 + $0xa8] sm:$0xff]
    %v263 = vld [vmem:[#allocation6 + $0xb0] sm:$0xff]
    %v264 = vld [vmem:[#allocation6 + $0xb8] sm:$0xff]
    %v265 = vld [vmem:[#allocation6 + $0xc0] sm:$0xff]
    %v266 = vld [vmem:[#allocation6 + $0xc8] sm:$0xff]
    %v267 = vld [vmem:[#allocation6 + $0xd0] sm:$0xff]
    %v268 = vld [vmem:[#allocation6 + $0xd8] sm:$0xff]
    %v269 = vld [vmem:[#allocation6 + $0xe0] sm:$0xff]
    %v270 = vld [vmem:[#allocation6 + $0xe8] sm:$0xff]
    %v271 = vld [vmem:[#allocation6 + $0xf0] sm:$0xff]
    %v272 = vld [vmem:[#allocation6 + $0xf8] sm:$0xff]
    %v273 = vld [vmem:[#allocation6 + $0x100] sm:$0xff]
    %v274 = vld [vmem:[#allocation6 + $0x108] sm:$0xff]
    %v275 = vld [vmem:[#allocation6 + $0x110] sm:$0xff]
    %v276 = vld [vmem:[#allocation6 + $0x118] sm:$0xff]
    %v277 = vld [vmem:[#allocation6 + $0x120] sm:$0xff]
    %v278 = vld [vmem:[#allocation6 + $0x128] sm:$0xff]
    %v279 = vld [vmem:[#allocation6 + $0x130] sm:$0xff]
    %v280 = vld [vmem:[#allocation6 + $0x138] sm:$0xff]
    %v281 = vld [vmem:[#allocation6 + $0x140] sm:$0xff]
    %v282 = vld [vmem:[#allocation6 + $0x148] sm:$0xff]
    %v283 = vld [vmem:[#allocation6 + $0x150] sm:$0xff]
    %v284 = vld [vmem:[#allocation6 + $0x158] sm:$0xff]
    %v285 = vld [vmem:[#allocation6 + $0x160] sm:$0xff]
    %v286 = vld [vmem:[#allocation6 + $0x168] sm:$0xff]
    %v287 = vld [vmem:[#allocation6 + $0x170] sm:$0xff]
    %v288 = vld [vmem:[#allocation6 + $0x178] sm:$0xff]
    %v289 = vld [vmem:[#allocation6 + $0x180] sm:$0xff]
    %v290 = vld [vmem:[#allocation6 + $0x188] sm:$0xff]
    %v291 = vld [vmem:[#allocation6 + $0x190] sm:$0xff]
    %v292 = vld [vmem:[#allocation6 + $0x198] sm:$0xff]
    %v293 = vld [vmem:[#allocation6 + $0x1a0] sm:$0xff]
    %v294 = vld [vmem:[#allocation6 + $0x1a8] sm:$0xff]
    %v295 = vld [vmem:[#allocation6 + $0x1b0] sm:$0xff]
    %v296 = vld [vmem:[#allocation6 + $0x1b8] sm:$0xff]
    %v297 = vld [vmem:[#allocation6 + $0x1c0] sm:$0xff]
    %v298 = vld [vmem:[#allocation6 + $0x1c8] sm:$0xff]
    %v299 = vld [vmem:[#allocation6 + $0x1d0] sm:$0xff]
    %v300 = vld [vmem:[#allocation6 + $0x1d8] sm:$0xff]
    %v301 = vld [vmem:[#allocation6 + $0x1e0] sm:$0xff]
    %v302 = vld [vmem:[#allocation6 + $0x1e8] sm:$0xff]
    %v303 = vld [vmem:[#allocation6 + $0x1f0] sm:$0xff]
    %v304 = vld [vmem:[#allocation6 + $0x1f8] sm:$0xff]
    %v305 = vld [vmem:[#allocation8] sm:$0x3]
    %v307 = vperm.slane %v305, 0
    %v308 = vperm.slane %v305, 1
    %311 = vmatpush.msra.mxu0 %v271
    %312 = vmatpush.msra.mxu0 %v269
    %313 = vmatpush.msra.mxu0 %v267
    %314 = vmatpush.msra.mxu0 %v265
    %315 = vmatpush.msra.mxu0 %v263
    %316 = vmatpush.msra.mxu0 %v261
    %317 = vmatpush.msra.mxu0 %v259
    %318 = vmatpush.msra.mxu0 %v257
    %319 = vmatpush.msra.mxu0 %v255
    %320 = vmatpush.msra.mxu0 %v253
    %321 = vmatpush.msra.mxu0 %v251
    %322 = vmatpush.msra.mxu0 %v249
    %323 = vmatpush.msra.mxu0 %v247
    %324 = vmatpush.msra.mxu0 %v245
    %325 = vmatpush.msra.mxu0 %v243
    %326 = vmatpush.msra.mxu0 %v241
    %327 = vmatmul.f32.gmra.mxu0 %v237
    %v328 = vpop.f32.mrf.mxu0
    %v329 = vadd.f32 %v307, %v328
    %330 = vmatmul.f32.gmra.mxu0 %v239
    %v331 = vpop.f32.mrf.mxu0
    %v332 = vadd.f32 %v307, %v331
    %333 = vdwg.mxu0
    %334 = vmatpush.msra.mxu0 %v303
    %335 = vmatpush.msra.mxu0 %v301
    %336 = vmatpush.msra.mxu0 %v299
    %337 = vmatpush.msra.mxu0 %v297
    %338 = vmatpush.msra.mxu0 %v295
    %339 = vmatpush.msra.mxu0 %v293
    %340 = vmatpush.msra.mxu0 %v291
    %341 = vmatpush.msra.mxu0 %v289
    %342 = vmatpush.msra.mxu0 %v287
    %343 = vmatpush.msra.mxu0 %v285
    %344 = vmatpush.msra.mxu0 %v283
    %345 = vmatpush.msra.mxu0 %v281
    %346 = vmatpush.msra.mxu0 %v279
    %347 = vmatpush.msra.mxu0 %v277
    %348 = vmatpush.msra.mxu0 %v275
    %349 = vmatpush.msra.mxu0 %v273
    %350 = vmatmul.f32.gmra.mxu0 %v238
    %v351 = vpop.f32.mrf.mxu0
    %v352 = vadd.f32 %v329, %v351
    %353 = vmatmul.f32.gmra.mxu0 %v240
    %v354 = vpop.f32.mrf.mxu0
    %v355 = vadd.f32 %v332, %v354
    %356 = vdwg.mxu0
    %357 = vmatpush.msra.mxu0 %v272
    %358 = vmatpush.msra.mxu0 %v270
    %359 = vmatpush.msra.mxu0 %v268
    %360 = vmatpush.msra.mxu0 %v266
    %361 = vmatpush.msra.mxu0 %v264
    %362 = vmatpush.msra.mxu0 %v262
    %363 = vmatpush.msra.mxu0 %v260
    %364 = vmatpush.msra.mxu0 %v258
    %365 = vmatpush.msra.mxu0 %v256
    %366 = vmatpush.msra.mxu0 %v254
    %367 = vmatpush.msra.mxu0 %v252
    %368 = vmatpush.msra.mxu0 %v250
    %369 = vmatpush.msra.mxu0 %v248
    %370 = vmatpush.msra.mxu0 %v246
    %371 = vmatpush.msra.mxu0 %v244
    %372 = vmatpush.msra.mxu0 %v242
    %373 = vmatmul.f32.gmra.mxu0 %v237
    %v374 = vpop.f32.mrf.mxu0
    %v375 = vadd.f32 %v308, %v374
    %376 = vmatmul.f32.gmra.mxu0 %v239
    %v377 = vpop.f32.mrf.mxu0
    %v378 = vadd.f32 %v308, %v377
    %379 = vdwg.mxu0
    %380 = vmatpush.msra.mxu0 %v304
    %381 = vmatpush.msra.mxu0 %v302
    %382 = vmatpush.msra.mxu0 %v300
    %383 = vmatpush.msra.mxu0 %v298
    %384 = vmatpush.msra.mxu0 %v296
    %385 = vmatpush.msra.mxu0 %v294
    %386 = vmatpush.msra.mxu0 %v292
    %387 = vmatpush.msra.mxu0 %v290
    %388 = vmatpush.msra.mxu0 %v288
    %389 = vmatpush.msra.mxu0 %v286
    %390 = vmatpush.msra.mxu0 %v284
    %391 = vmatpush.msra.mxu0 %v282
    %392 = vmatpush.msra.mxu0 %v280
    %393 = vmatpush.msra.mxu0 %v278
    %394 = vmatpush.msra.mxu0 %v276
    %395 = vmatpush.msra.mxu0 %v274
    %396 = vmatmul.f32.gmra.mxu0 %v238
    %v397 = vpop.f32.mrf.mxu0
    %v398 = vadd.f32 %v375, %v397
    %399 = vmatmul.f32.gmra.mxu0 %v240
    %v400 = vpop.f32.mrf.mxu0
    %v401 = vadd.f32 %v378, %v400
    %402 = vdwg.mxu0
    %s403 = sld [smem:[#allocation11]]
    %vm404 = vcmp.gt.f32.partialorder %v352, 0.0
    %vm405 = vcmp.gt.f32.partialorder %v355, 0.0
    %v406 = vstv %s403
    %v407 = vmul.f32 %v406, %v352
    %v408 = vmul.f32 %v406, %v355
    %v409 = vsel %vm404, %v352, %v407
    %v410 = vsel %vm405, %v355, %v408
    %v411 = vld [vmem:[#allocation9] sm:$0xff]
    %v412 = vld [vmem:[#allocation9 + $0x8] sm:$0xff]
    %v413 = vld [vmem:[#allocation9 + $0x10] sm:$0xff]
    %v414 = vld [vmem:[#allocation9 + $0x18] sm:$0xff]
    %v415 = vld [vmem:[#allocation9 + $0x20] sm:$0xff]
    %v416 = vld [vmem:[#allocation9 + $0x28] sm:$0xff]
    %v417 = vld [vmem:[#allocation9 + $0x30] sm:$0xff]
    %v418 = vld [vmem:[#allocation9 + $0x38] sm:$0xff]
    %v419 = vld [vmem:[#allocation9 + $0x40] sm:$0xff]
    %v420 = vld [vmem:[#allocation9 + $0x48] sm:$0xff]
    %v421 = vld [vmem:[#allocation9 + $0x50] sm:$0xff]
    %v422 = vld [vmem:[#allocation9 + $0x58] sm:$0xff]
    %v423 = vld [vmem:[#allocation9 + $0x60] sm:$0xff]
    %v424 = vld [vmem:[#allocation9 + $0x68] sm:$0xff]
    %v425 = vld [vmem:[#allocation9 + $0x70] sm:$0xff]
    %v426 = vld [vmem:[#allocation9 + $0x78] sm:$0xff]
    %v427 = vld [vmem:[%s4] sm:$0x1]
    %v428 = vperm.slane %v427, 0
    %429 = vmatpush.msra.mxu0 %v426
    %430 = vmatpush.msra.mxu0 %v425
    %431 = vmatpush.msra.mxu0 %v424
    %432 = vmatpush.msra.mxu0 %v423
    %433 = vmatpush.msra.mxu0 %v422
    %434 = vmatpush.msra.mxu0 %v421
    %435 = vmatpush.msra.mxu0 %v420
    %436 = vmatpush.msra.mxu0 %v419
    %437 = vmatpush.msra.mxu0 %v418
    %438 = vmatpush.msra.mxu0 %v417
    %439 = vmatpush.msra.mxu0 %v416
    %440 = vmatpush.msra.mxu0 %v415
    %441 = vmatpush.msra.mxu0 %v414
    %442 = vmatpush.msra.mxu0 %v413
    %443 = vmatpush.msra.mxu0 %v412
    %444 = vmatpush.msra.mxu0 %v411
    %445 = vmatmul.f32.gmra.mxu0 %v409
    %v446 = vpop.f32.mrf.mxu0
    %v447 = vadd.f32 %v428, %v446
    %448 = vmatmul.f32.gmra.mxu0 %v410
    %v449 = vpop.f32.mrf.mxu0
    %v450 = vadd.f32 %v428, %v449
    %451 = vdwg.mxu0
    %s452 = sld [smem:[#allocation11 + $0x1]]
    %vm453 = vcmp.gt.f32.partialorder %v447, 0.0
    %vm454 = vcmp.gt.f32.partialorder %v450, 0.0
    %v455 = vstv %s452
    %v456 = vmul.f32 %v455, %v447
    %v457 = vmul.f32 %v455, %v450
    %v458 = vsel %vm453, %v447, %v456
    %v459 = vsel %vm454, %v450, %v457
    %s460 = scalar_lea.vmem [#allocation9], 128
    %v461 = vld [vmem:[%s460] sm:$0xff]
    %v462 = vld [vmem:[%s460 + $0x8] sm:$0xff]
    %v463 = vld [vmem:[%s460 + $0x10] sm:$0xff]
    %v464 = vld [vmem:[%s460 + $0x18] sm:$0xff]
    %v465 = vld [vmem:[%s460 + $0x20] sm:$0xff]
    %v466 = vld [vmem:[%s460 + $0x28] sm:$0xff]
    %v467 = vld [vmem:[%s460 + $0x30] sm:$0xff]
    %v468 = vld [vmem:[%s460 + $0x38] sm:$0xff]
    %v469 = vld [vmem:[%s460 + $0x40] sm:$0xff]
    %v470 = vld [vmem:[%s460 + $0x48] sm:$0xff]
    %v471 = vld [vmem:[%s460 + $0x50] sm:$0xff]
    %v472 = vld [vmem:[%s460 + $0x58] sm:$0xff]
    %v473 = vld [vmem:[%s460 + $0x60] sm:$0xff]
    %v474 = vld [vmem:[%s460 + $0x68] sm:$0xff]
    %v475 = vld [vmem:[%s460 + $0x70] sm:$0xff]
    %v476 = vld [vmem:[%s460 + $0x78] sm:$0xff]
    %v477 = vld [vmem:[%s4 + $0x1] sm:$0x1]
    %v478 = vperm.slane %v477, 0
    %479 = vmatpush.msra.mxu0 %v476
    %480 = vmatpush.msra.mxu0 %v475
    %481 = vmatpush.msra.mxu0 %v474
    %482 = vmatpush.msra.mxu0 %v473
    %483 = vmatpush.msra.mxu0 %v472
    %484 = vmatpush.msra.mxu0 %v471
    %485 = vmatpush.msra.mxu0 %v470
    %486 = vmatpush.msra.mxu0 %v469
    %487 = vmatpush.msra.mxu0 %v468
    %488 = vmatpush.msra.mxu0 %v467
    %489 = vmatpush.msra.mxu0 %v466
    %490 = vmatpush.msra.mxu0 %v465
    %491 = vmatpush.msra.mxu0 %v464
    %492 = vmatpush.msra.mxu0 %v463
    %493 = vmatpush.msra.mxu0 %v462
    %494 = vmatpush.msra.mxu0 %v461
    %495 = vmatmul.f32.gmra.mxu0 %v458
    %v496 = vpop.f32.mrf.mxu0
    %v497 = vadd.f32 %v478, %v496
    %498 = vmatmul.f32.gmra.mxu0 %v459
    %v499 = vpop.f32.mrf.mxu0
    %v500 = vadd.f32 %v478, %v499
    %501 = vdwg.mxu0
    %s502 = sld [smem:[#allocation11 + $0x2]]
    %vm503 = vcmp.gt.f32.partialorder %v497, 0.0
    %vm504 = vcmp.gt.f32.partialorder %v500, 0.0
    %v505 = vstv %s502
    %v506 = vmul.f32 %v505, %v497
    %v507 = vmul.f32 %v505, %v500
    %v508 = vsel %vm503, %v497, %v506
    %v509 = vsel %vm504, %v500, %v507
    %v510 = vadd.f32 %v508, %v398
    %v511 = vadd.f32 %v509, %v401
    %512 = vst [vmem:[#allocation12] sm:$0xff] %v510
    %513 = vst [vmem:[#allocation12 + $0x8] sm:$0xff] %v511
    // Predicated region
    $region46: #{tpu_custom_call.1} parent=1 // pred_check
      _
    $region47: #{tpu_custom_call.1} parent=1 // pred_check_branch
      %515 = sbr.rel (0) target = $region49
    $region48: #{tpu_custom_call.1} parent=1 // pred_region
      %517 = vsyncadd [#allocation4], 0
      %s518 = sshll.u32 [#allocation12], 4
      %s519 = int_to_ptr.vmem [resolvable:$true] %s518
      %s520 = sshll.u32 %s6, 4
      %s521 = int_to_ptr.hbm [resolvable:$true] %s520
      %526 = dma.vmem_to_hbm [thread:$0]  %s519, 256, %s521, [#allocation4], 128, 128, 8
    $region49: #{tpu_custom_call.1} parent=1 // pred_fallthru
      _
    // Predicated region
    $region50: #{tpu_custom_call.1} parent=1 // pred_check
      _
    $region51: #{tpu_custom_call.1} parent=1 // pred_check_branch
      %528 = sbr.rel (0) target = $region53
    $region52: #{tpu_custom_call.1} parent=1 // pred_region
      %530 = dma.done [#allocation4], 256
    $region53: #{tpu_custom_call.1} parent=1 // pred_fallthru
      _
    %531 = vsyncpa [#allocation3], 1
    %532 = vsyncpa [#allocation7], 1
    %533 = vsyncpa [#allocation10], 1
    %534 = vsyncpa [#allocation4], 1
    %535 = vsyncpa [#allocation5], 1

</llo_original>
